<compile_context>
chip_gen: v6e
topology: v6e:2x2x1
jax: 0.10.0
libtpu: 0.0.40
codegen_flags: <defaults>
</compile_context>

<pallas_src>
import functools

import jax
import jax.numpy as jnp
from jax.experimental import pallas as pl
from jax.experimental.pallas import tpu as pltpu


def _round_up(x, m):
    return ((x + m - 1) // m) * m


def _decoder_kernel(z_ref, w1_ref, b1_ref, w2_ref, b2_ref, o_ref):
    # z_ref : [TB, Dz]      w1_ref: [Dz, Hp]    b1_ref: [1, Hp]
    # w2_ref: [Hp, Dxp]     b2_ref: [1, Dxp]    o_ref : [TB, Dxp]
    z = z_ref[...]

    # Layer 1: Linear(Dz -> Hp) + Tanh   (MXU matmul, f32 accumulation)
    h = jnp.dot(z, w1_ref[...], preferred_element_type=jnp.float32)
    h = jnp.tanh(h + b1_ref[...])

    # Layer 2: Linear(Hp -> Dxp) + Sigmoid
    y = jnp.dot(h, w2_ref[...], preferred_element_type=jnp.float32)
    y = jax.nn.sigmoid(y + b2_ref[...])

    o_ref[...] = y.astype(o_ref.dtype)


@functools.partial(jax.jit, static_argnames=("block_b",))
def decoder_forward(z, w1, b1, w2, b2, *, block_b=256):
    """z: [B, Dz] -> x_r: [B, Dx].  Any B; batch is padded internally."""
    B, Dz = z.shape
    H = w1.shape[1]
    Dx = w2.shape[1]

    # --- layout padding (all pads are zeros; sliced off / math-neutral) ----
    H_pad = _round_up(H, 128)                      # 500 -> 512: full lane tiles
    Dx_pad = _round_up(Dx, 128)                    # lane-dense output stores
    block_b_eff = min(block_b, _round_up(B, 8))    # don't over-tile tiny batches
    B_pad = _round_up(B, block_b_eff)

    zp = jnp.pad(z, ((0, B_pad - B), (0, 0))) if B_pad != B else z
    w1p = jnp.pad(w1, ((0, 0), (0, H_pad - H)))
    b1p = jnp.pad(b1, ((0, 0), (0, H_pad - H)))
    w2p = jnp.pad(w2, ((0, H_pad - H), (0, Dx_pad - Dx)))
    b2p = jnp.pad(b2, ((0, 0), (0, Dx_pad - Dx)))

    grid = (B_pad // block_b_eff,)

    itemsize = jnp.dtype(z.dtype).itemsize
    cost = pl.CostEstimate(
        flops=2 * B_pad * (Dz * H_pad + H_pad * Dx_pad),
        transcendentals=B_pad * (H_pad + Dx_pad),
        bytes_accessed=(zp.size + w1p.size + b1p.size + w2p.size + b2p.size
                        + B_pad * Dx_pad) * itemsize,
    )

    out = pl.pallas_call(
        _decoder_kernel,
        out_shape=jax.ShapeDtypeStruct((B_pad, Dx_pad), z.dtype),
        grid_spec=pltpu.PrefetchScalarGridSpec(
            num_scalar_prefetch=0,
            grid=grid,
            in_specs=[
                pl.BlockSpec((block_b_eff, Dz), lambda i: (i, 0)),  # z tile
                pl.BlockSpec((Dz, H_pad), lambda i: (0, 0)),        # W1 (full)
                pl.BlockSpec((1, H_pad), lambda i: (0, 0)),         # b1
                pl.BlockSpec((H_pad, Dx_pad), lambda i: (0, 0)),    # W2 (full)
                pl.BlockSpec((1, Dx_pad), lambda i: (0, 0)),        # b2
            ],
            out_specs=pl.BlockSpec((block_b_eff, Dx_pad), lambda i: (i, 0)),
        ),
        compiler_params=pltpu.CompilerParams(
            dimension_semantics=("parallel",),   # batch tiles shard across TCs (v7x)
        ),
        cost_estimate=cost,
    )(zp, w1p, b1p, w2p, b2p)

    return out[:B, :Dx]


def init_decoder_params(key, Dx, Dz, H=500, dtype=jnp.float32):
    """Deterministic synthetic init matching nn.Linear shapes.

    PyTorch stores Linear weights as [out, in]; we keep them as [in, out] so
    the kernel computes x @ W + b directly (same math as x @ W_pt.T + b).
    """
    k1, k2, k3, k4 = jax.random.split(key, 4)
    lim1 = 1.0 / jnp.sqrt(Dz)
    lim2 = 1.0 / jnp.sqrt(H)
    w1 = jax.random.uniform(k1, (Dz, H), dtype, minval=-lim1, maxval=lim1)
    b1 = jax.random.uniform(k2, (1, H), dtype, minval=-lim1, maxval=lim1)
    w2 = jax.random.uniform(k3, (H, Dx), dtype, minval=-lim2, maxval=lim2)
    b2 = jax.random.uniform(k4, (1, Dx), dtype, minval=-lim2, maxval=lim2)
    return w1, b1, w2, b2


def decoder_reference(z, w1, b1, w2, b2):
    """Pure-JAX reference of the PyTorch forward."""
    h = jnp.tanh(z @ w1 + b1)
    return jax.nn.sigmoid(h @ w2 + b2)


if __name__ == "__main__":
    # Small shapes consistent with the module: z: [B, Dz] -> x_r: [B, Dx]
    B, Dz, Dx, H = 8, 32, 64, 500

    key = jax.random.PRNGKey(0)
    kz, kp = jax.random.split(key)
    z = jax.random.normal(kz, (B, Dz), jnp.float32)
    w1, b1, w2, b2 = init_decoder_params(kp, Dx=Dx, Dz=Dz, H=H)

    x_r = decoder_forward(z, w1, b1, w2, b2)
    x_r = jax.block_until_ready(x_r)

    ref = decoder_reference(z, w1, b1, w2, b2)
    assert x_r.shape == (B, Dx)
    assert jnp.allclose(x_r, ref, atol=1e-5, rtol=1e-5)

    # Also exercise the non-multiple / padded-batch path.
    B2 = 12
    z2 = jax.random.normal(kz, (B2, Dz), jnp.float32)
    x_r2 = jax.block_until_ready(decoder_forward(z2, w1, b1, w2, b2))
    ref2 = decoder_reference(z2, w1, b1, w2, b2)
    assert x_r2.shape == (B2, Dx)
    assert jnp.allclose(x_r2, ref2, atol=1e-5, rtol=1e-5)

    print("KERNEL_OK")
</pallas_src>

<mosaic_0001>
module attributes {stable_mosaic.version = 11 : i64} {
  func.func @_decoder_kernel(%arg0: i32, %arg1: memref<8x32xf32, #tpu.memory_space<vmem>>, %arg2: memref<32x512xf32, #tpu.memory_space<vmem>>, %arg3: memref<1x512xf32, #tpu.memory_space<vmem>>, %arg4: memref<512x128xf32, #tpu.memory_space<vmem>>, %arg5: memref<1x128xf32, #tpu.memory_space<vmem>>, %arg6: memref<8x128xf32, #tpu.memory_space<vmem>>) attributes {dimension_semantics = [#tpu.dimension_semantics<parallel>], iteration_bounds = array<i64: 1>, scalar_prefetch = 0 : i64, scratch_operands = 0 : i64, tpu.core_type = #tpu.core_type<tc>, window_params = [{transform_indices = @transform_0, window_bounds = array<i64: 8, 32>}, {pipeline_mode = #tpu.pipeline_mode<synchronous>, transform_indices = @transform_1, window_bounds = array<i64: 32, 512>}, {pipeline_mode = #tpu.pipeline_mode<synchronous>, transform_indices = @transform_2, window_bounds = array<i64: 1, 512>}, {pipeline_mode = #tpu.pipeline_mode<synchronous>, transform_indices = @transform_3, window_bounds = array<i64: 512, 128>}, {pipeline_mode = #tpu.pipeline_mode<synchronous>, transform_indices = @transform_4, window_bounds = array<i64: 1, 128>}, {transform_indices = @transform_5, window_bounds = array<i64: 8, 128>}]} {
    %c0 = arith.constant 0 : index
    %c0_0 = arith.constant 0 : index
    %0 = vector.load %arg1[%c0, %c0_0] : memref<8x32xf32, #tpu.memory_space<vmem>>, vector<8x32xf32>
    %c0_1 = arith.constant 0 : index
    %c0_2 = arith.constant 0 : index
    %1 = vector.load %arg2[%c0_1, %c0_2] : memref<32x512xf32, #tpu.memory_space<vmem>>, vector<32x512xf32>
    %cst = arith.constant dense<0.000000e+00> : vector<8x512xf32>
    %2 = tpu.matmul %0, %1, %cst {dimension_numbers = #tpu.dot_dimension_numbers<[1], [0], [0], [1], [0, 0, 1, 1], [], []>} : vector<8x32xf32>, vector<32x512xf32>, vector<8x512xf32> -> vector<8x512xf32>
    %c0_3 = arith.constant 0 : index
    %c0_4 = arith.constant 0 : index
    %3 = vector.load %arg3[%c0_3, %c0_4] : memref<1x512xf32, #tpu.memory_space<vmem>>, vector<1x512xf32>
    %4 = vector.broadcast %3 : vector<1x512xf32> to vector<8x512xf32>
    %5 = arith.addf %2, %4 : vector<8x512xf32>
    %6 = math.tanh %5 : vector<8x512xf32>
    %c0_5 = arith.constant 0 : index
    %c0_6 = arith.constant 0 : index
    %7 = vector.load %arg4[%c0_5, %c0_6] : memref<512x128xf32, #tpu.memory_space<vmem>>, vector<512x128xf32>
    %cst_7 = arith.constant dense<0.000000e+00> : vector<8x128xf32>
    %8 = tpu.matmul %6, %7, %cst_7 {dimension_numbers = #tpu.dot_dimension_numbers<[1], [0], [0], [1], [0, 0, 1, 1], [], []>} : vector<8x512xf32>, vector<512x128xf32>, vector<8x128xf32> -> vector<8x128xf32>
    %c0_8 = arith.constant 0 : index
    %c0_9 = arith.constant 0 : index
    %9 = vector.load %arg5[%c0_8, %c0_9] : memref<1x128xf32, #tpu.memory_space<vmem>>, vector<1x128xf32>
    %10 = vector.broadcast %9 : vector<1x128xf32> to vector<8x128xf32>
    %11 = arith.addf %8, %10 : vector<8x128xf32>
    %12 = arith.negf %11 : vector<8x128xf32>
    %13 = math.exp %12 : vector<8x128xf32>
    %cst_10 = arith.constant 1.000000e+00 : f32
    %14 = vector.broadcast %cst_10 : f32 to vector<8x128xf32>
    %15 = arith.addf %14, %13 : vector<8x128xf32>
    %16 = arith.divf %14, %15 : vector<8x128xf32>
    %c0_11 = arith.constant 0 : index
    %c0_12 = arith.constant 0 : index
    %17 = vector.load %arg6[%c0_11, %c0_12] : memref<8x128xf32, #tpu.memory_space<vmem>>, vector<8x128xf32>
    tpu.vector_store %arg6[%c0_11, %c0_12], %16 {strides = array<i32>} : memref<8x128xf32, #tpu.memory_space<vmem>>, vector<8x128xf32>,
    return
  }
  func.func @transform_0(%arg0: i32) -> (i32, i32) {
    %c0_i32 = arith.constant 0 : i32
    %c0_i32_0 = arith.constant 0 : i32
    return %arg0, %c0_i32 : i32, i32
  }
  func.func @transform_1(%arg0: i32) -> (i32, i32) {
    %c0_i32 = arith.constant 0 : i32
    %c0_i32_0 = arith.constant 0 : i32
    %c0_i32_1 = arith.constant 0 : i32
    return %c0_i32, %c0_i32_0 : i32, i32
  }
  func.func @transform_2(%arg0: i32) -> (i32, i32) {
    %c0_i32 = arith.constant 0 : i32
    %c0_i32_0 = arith.constant 0 : i32
    %c0_i32_1 = arith.constant 0 : i32
    return %c0_i32, %c0_i32_0 : i32, i32
  }
  func.func @transform_3(%arg0: i32) -> (i32, i32) {
    %c0_i32 = arith.constant 0 : i32
    %c0_i32_0 = arith.constant 0 : i32
    %c0_i32_1 = arith.constant 0 : i32
    return %c0_i32, %c0_i32_0 : i32, i32
  }
  func.func @transform_4(%arg0: i32) -> (i32, i32) {
    %c0_i32 = arith.constant 0 : i32
    %c0_i32_0 = arith.constant 0 : i32
    %c0_i32_1 = arith.constant 0 : i32
    return %c0_i32, %c0_i32_0 : i32, i32
  }
  func.func @transform_5(%arg0: i32) -> (i32, i32) {
    %c0_i32 = arith.constant 0 : i32
    %c0_i32_0 = arith.constant 0 : i32
    return %arg0, %c0_i32 : i32, i32
  }
}

</mosaic_0001>

<llo_original>
// kernel: decoder_forward.1
$region0: #{decoder_forward.1}
  #allocation0 [shape = 'u32[]', space=smem, size = 0x4, offset = 0x4, fixed_abs, tag = 'smem constant byte address 0x4 - core index']
  #allocation1 [shape = 'u32[144,128]{1,0:T(1,128)}', space=vmem, size = 0x12000, scoped, tag = 'internal scratch']
  %s0 = inlined_call_operand.vmem [shape: f32[8,32], index: 0, kind: input, shape index: {}]
  %s1 = inlined_call_operand.vmem [shape: f32[32,512], index: 1, kind: input, shape index: {}]
  %s2 = inlined_call_operand.vmem [shape: f32[1,512], index: 2, kind: input, shape index: {}]
  %s3 = inlined_call_operand.vmem [shape: f32[512,128], index: 3, kind: input, shape index: {}]
  %s4 = inlined_call_operand.vmem [shape: f32[1,128], index: 4, kind: input, shape index: {}]
  %s5 = inlined_call_operand.hbm [shape: f32[8,128], index: 5, kind: output, shape index: {}]
  %s6 = sld [smem:[#allocation0]]
  $region30: #{decoder_forward.1} parent=0
    _
  %s8 = ssub.s32 1, %s6
  %s9 = scalar_select 0, %s8, %s6
  $region1: #{decoder_forward.1} parent=0
    #allocation2 [shape = 'u8[4096]{0}', space=vmem, size = 0x1000, scoped, tag = 'output window, operand 0, single buffered']
    #allocation3 [shape = 's32[1]{0}', space=sflag, size = 0x4, scoped, tag = 'scoped memory for decoder_forward.1']
    %10 = vsyncpa [#allocation3], 0
    // Predicated region
    $region2: #{decoder_forward.1} parent=1 // pred_check
      _
    $region3: #{decoder_forward.1} parent=1 // pred_check_branch
      %12 = sbr.rel (0) target = $region5
    $region4: #{decoder_forward.1} parent=1 // pred_region
      _
    $region5: #{decoder_forward.1} parent=1 // pred_fallthru
      _
    // Predicated region
    $region6: #{decoder_forward.1} parent=1 // pred_check
      _
    $region7: #{decoder_forward.1} parent=1 // pred_check_branch
      %14 = sbr.rel (0) target = $region9
    $region8: #{decoder_forward.1} parent=1 // pred_region
      _
    $region9: #{decoder_forward.1} parent=1 // pred_fallthru
      _
    // Predicated region
    $region10: #{decoder_forward.1} parent=1 // pred_check
      _
    $region11: #{decoder_forward.1} parent=1 // pred_check_branch
      %16 = sbr.rel (0) target = $region13
    $region12: #{decoder_forward.1} parent=1 // pred_region
      _
    $region13: #{decoder_forward.1} parent=1 // pred_fallthru
      _
    // Predicated region
    $region14: #{decoder_forward.1} parent=1 // pred_check
      _
    $region15: #{decoder_forward.1} parent=1 // pred_check_branch
      %18 = sbr.rel (0) target = $region17
    $region16: #{decoder_forward.1} parent=1 // pred_region
      _
    $region17: #{decoder_forward.1} parent=1 // pred_fallthru
      _
    // Predicated region
    $region18: #{decoder_forward.1} parent=1 // pred_check
      _
    $region19: #{decoder_forward.1} parent=1 // pred_check_branch
      %20 = sbr.rel (0) target = $region21
    $region20: #{decoder_forward.1} parent=1 // pred_region
      _
    $region21: #{decoder_forward.1} parent=1 // pred_fallthru
      _
    %v21 = vld [vmem:[%s0] sm:$0xff]
    %v22 = vld [vmem:[%s1] sm:$0xff]
    %v23 = vld [vmem:[%s1 + $0x8] sm:$0xff]
    %v24 = vld [vmem:[%s1 + $0x10] sm:$0xff]
    %v25 = vld [vmem:[%s1 + $0x18] sm:$0xff]
    %v26 = vld [vmem:[%s1 + $0x20] sm:$0xff]
    %v27 = vld [vmem:[%s1 + $0x28] sm:$0xff]
    %v28 = vld [vmem:[%s1 + $0x30] sm:$0xff]
    %v29 = vld [vmem:[%s1 + $0x38] sm:$0xff]
    %v30 = vld [vmem:[%s1 + $0x40] sm:$0xff]
    %v31 = vld [vmem:[%s1 + $0x48] sm:$0xff]
    %v32 = vld [vmem:[%s1 + $0x50] sm:$0xff]
    %v33 = vld [vmem:[%s1 + $0x58] sm:$0xff]
    %v34 = vld [vmem:[%s1 + $0x60] sm:$0xff]
    %v35 = vld [vmem:[%s1 + $0x68] sm:$0xff]
    %v36 = vld [vmem:[%s1 + $0x70] sm:$0xff]
    %v37 = vld [vmem:[%s1 + $0x78] sm:$0xff]
    %v38 = vld [vmem:[%s2] sm:$0xf]
    %v40 = vlaneseq
    %v41 = vshrl.u32 %v40, 7
    %v42 = vsub.s32 0, %v41
    %v43 = vrot.slane %v38, %v42
    %v44 = vlaneseq
    %v45 = vshrl.u32 %v44, 7
    %v46 = vsub.s32 1, %v45
    %v47 = vrot.slane %v38, %v46
    %v48 = vlaneseq
    %v49 = vshrl.u32 %v48, 7
    %v50 = vsub.s32 2, %v49
    %v51 = vrot.slane %v38, %v50
    %v52 = vlaneseq
    %v53 = vshrl.u32 %v52, 7
    %v54 = vsub.s32 3, %v53
    %v55 = vrot.slane %v38, %v54
    %vm60 = vcmask 261120
    %v62 = vsel %vm60, %v21, 0
    %64 = vmatprep.subr.mxu0 0.0
    %65 = vmatpush1.msra.mxu0 0.0
    %66 = vmatprep.subr.mxu0 0.0
    %67 = vmatpush1.msra.mxu0 0.0
    %68 = vmatprep.subr.mxu0 0.0
    %69 = vmatpush1.msra.mxu0 0.0
    %70 = vmatprep.subr.mxu0 0.0
    %71 = vmatpush1.msra.mxu0 0.0
    %72 = vmatprep.subr.mxu0 0.0
    %73 = vmatpush1.msra.mxu0 0.0
    %74 = vmatprep.subr.mxu0 0.0
    %75 = vmatpush1.msra.mxu0 0.0
    %76 = vmatprep.subr.mxu0 0.0
    %77 = vmatpush1.msra.mxu0 0.0
    %78 = vmatprep.subr.mxu0 0.0
    %79 = vmatpush1.msra.mxu0 0.0
    %80 = vmatprep.subr.mxu0 0.0
    %81 = vmatpush1.msra.mxu0 0.0
    %82 = vmatprep.subr.mxu0 0.0
    %83 = vmatpush1.msra.mxu0 0.0
    %84 = vmatprep.subr.mxu0 0.0
    %85 = vmatpush1.msra.mxu0 0.0
    %86 = vmatprep.subr.mxu0 0.0
    %87 = vmatpush1.msra.mxu0 0.0
    %88 = vmatprep.subr.mxu0 %v35
    %89 = vmatpush1.msra.mxu0 %v34
    %90 = vmatprep.subr.mxu0 %v31
    %91 = vmatpush1.msra.mxu0 %v30
    %92 = vmatprep.subr.mxu0 %v27
    %93 = vmatpush1.msra.mxu0 %v26
    %94 = vmatprep.subr.mxu0 %v23
    %95 = vmatpush1.msra.mxu0 %v22
    %96 = vmatprep.subr.mxu0 0.0
    %97 = vmatpush2.msra.mxu0 0.0
    %98 = vmatprep.subr.mxu0 0.0
    %99 = vmatpush2.msra.mxu0 0.0
    %100 = vmatprep.subr.mxu0 0.0
    %101 = vmatpush2.msra.mxu0 0.0
    %102 = vmatprep.subr.mxu0 0.0
    %103 = vmatpush2.msra.mxu0 0.0
    %104 = vmatprep.subr.mxu0 0.0
    %105 = vmatpush2.msra.mxu0 0.0
    %106 = vmatprep.subr.mxu0 0.0
    %107 = vmatpush2.msra.mxu0 0.0
    %108 = vmatprep.subr.mxu0 0.0
    %109 = vmatpush2.msra.mxu0 0.0
    %110 = vmatprep.subr.mxu0 0.0
    %111 = vmatpush2.msra.mxu0 0.0
    %112 = vmatprep.subr.mxu0 0.0
    %113 = vmatpush2.msra.mxu0 0.0
    %114 = vmatprep.subr.mxu0 0.0
    %115 = vmatpush2.msra.mxu0 0.0
    %116 = vmatprep.subr.mxu0 0.0
    %117 = vmatpush2.msra.mxu0 0.0
    %118 = vmatprep.subr.mxu0 0.0
    %119 = vmatpush2.msra.mxu0 0.0
    %120 = vmatprep.subr.mxu0 0.0
    %121 = vmatpush2.msra.mxu0 0.0
    %122 = vmatprep.subr.mxu0 0.0
    %123 = vmatpush2.msra.mxu0 0.0
    %124 = vmatprep.subr.mxu0 0.0
    %125 = vmatpush2.msra.mxu0 0.0
    %126 = vmatprep.subr.mxu0 0.0
    %127 = vmatpush2.msra.mxu0 0.0
    %128 = vmatprep.mubr.f32.mxu0 0.0
    %129 = vmatmul.mubr.f32.gmra.mxu0 %v62
    %v130 = vpop.f32.mrf.mxu0
    %v131 = vadd.f32 %v43, %v130
    %v132 = vpop.f32.mrf.mxu0
    %v133 = vadd.f32 %v47, %v132
    %134 = vdwg.mxu0
    %135 = vmatprep.subr.mxu0 0.0
    %136 = vmatpush1.msra.mxu0 0.0
    %137 = vmatprep.subr.mxu0 0.0
    %138 = vmatpush1.msra.mxu0 0.0
    %139 = vmatprep.subr.mxu0 0.0
    %140 = vmatpush1.msra.mxu0 0.0
    %141 = vmatprep.subr.mxu0 0.0
    %142 = vmatpush1.msra.mxu0 0.0
    %143 = vmatprep.subr.mxu0 0.0
    %144 = vmatpush1.msra.mxu0 0.0
    %145 = vmatprep.subr.mxu0 0.0
    %146 = vmatpush1.msra.mxu0 0.0
    %147 = vmatprep.subr.mxu0 0.0
    %148 = vmatpush1.msra.mxu0 0.0
    %149 = vmatprep.subr.mxu0 0.0
    %150 = vmatpush1.msra.mxu0 0.0
    %151 = vmatprep.subr.mxu0 0.0
    %152 = vmatpush1.msra.mxu0 0.0
    %153 = vmatprep.subr.mxu0 0.0
    %154 = vmatpush1.msra.mxu0 0.0
    %155 = vmatprep.subr.mxu0 0.0
    %156 = vmatpush1.msra.mxu0 0.0
    %157 = vmatprep.subr.mxu0 0.0
    %158 = vmatpush1.msra.mxu0 0.0
    %159 = vmatprep.subr.mxu0 %v37
    %160 = vmatpush1.msra.mxu0 %v36
    %161 = vmatprep.subr.mxu0 %v33
    %162 = vmatpush1.msra.mxu0 %v32
    %163 = vmatprep.subr.mxu0 %v29
    %164 = vmatpush1.msra.mxu0 %v28
    %165 = vmatprep.subr.mxu0 %v25
    %166 = vmatpush1.msra.mxu0 %v24
    %167 = vmatprep.subr.mxu0 0.0
    %168 = vmatpush2.msra.mxu0 0.0
    %169 = vmatprep.subr.mxu0 0.0
    %170 = vmatpush2.msra.mxu0 0.0
    %171 = vmatprep.subr.mxu0 0.0
    %172 = vmatpush2.msra.mxu0 0.0
    %173 = vmatprep.subr.mxu0 0.0
    %174 = vmatpush2.msra.mxu0 0.0
    %175 = vmatprep.subr.mxu0 0.0
    %176 = vmatpush2.msra.mxu0 0.0
    %177 = vmatprep.subr.mxu0 0.0
    %178 = vmatpush2.msra.mxu0 0.0
    %179 = vmatprep.subr.mxu0 0.0
    %180 = vmatpush2.msra.mxu0 0.0
    %181 = vmatprep.subr.mxu0 0.0
    %182 = vmatpush2.msra.mxu0 0.0
    %183 = vmatprep.subr.mxu0 0.0
    %184 = vmatpush2.msra.mxu0 0.0
    %185 = vmatprep.subr.mxu0 0.0
    %186 = vmatpush2.msra.mxu0 0.0
    %187 = vmatprep.subr.mxu0 0.0
    %188 = vmatpush2.msra.mxu0 0.0
    %189 = vmatprep.subr.mxu0 0.0
    %190 = vmatpush2.msra.mxu0 0.0
    %191 = vmatprep.subr.mxu0 0.0
    %192 = vmatpush2.msra.mxu0 0.0
    %193 = vmatprep.subr.mxu0 0.0
    %194 = vmatpush2.msra.mxu0 0.0
    %195 = vmatprep.subr.mxu0 0.0
    %196 = vmatpush2.msra.mxu0 0.0
    %197 = vmatprep.subr.mxu0 0.0
    %198 = vmatpush2.msra.mxu0 0.0
    %199 = vmatprep.mubr.f32.mxu0 0.0
    %200 = vmatmul.mubr.f32.gmra.mxu0 %v62
    %v201 = vpop.f32.mrf.mxu0
    %v202 = vadd.f32 %v51, %v201
    %v203 = vpop.f32.mrf.mxu0
    %v204 = vadd.f32 %v55, %v203
    %205 = vdwg.mxu0
    %v206 = vtanh.pop %v131
    %v207 = vtanh.pop %v133
    %v208 = vtanh.pop %v202
    %v209 = vtanh.pop %v204
    %v210 = vld [vmem:[%s3] sm:$0xff]
    %v211 = vld [vmem:[%s3 + $0x8] sm:$0xff]
    %v212 = vld [vmem:[%s3 + $0x10] sm:$0xff]
    %v213 = vld [vmem:[%s3 + $0x18] sm:$0xff]
    %v214 = vld [vmem:[%s3 + $0x20] sm:$0xff]
    %v215 = vld [vmem:[%s3 + $0x28] sm:$0xff]
    %v216 = vld [vmem:[%s3 + $0x30] sm:$0xff]
    %v217 = vld [vmem:[%s3 + $0x38] sm:$0xff]
    %v218 = vld [vmem:[%s3 + $0x40] sm:$0xff]
    %v219 = vld [vmem:[%s3 + $0x48] sm:$0xff]
    %v220 = vld [vmem:[%s3 + $0x50] sm:$0xff]
    %v221 = vld [vmem:[%s3 + $0x58] sm:$0xff]
    %v222 = vld [vmem:[%s3 + $0x60] sm:$0xff]
    %v223 = vld [vmem:[%s3 + $0x68] sm:$0xff]
    %v224 = vld [vmem:[%s3 + $0x70] sm:$0xff]
    %v225 = vld [vmem:[%s3 + $0x78] sm:$0xff]
    %v226 = vld [vmem:[%s3 + $0x80] sm:$0xff]
    %v227 = vld [vmem:[%s3 + $0x88] sm:$0xff]
    %v228 = vld [vmem:[%s3 + $0x90] sm:$0xff]
    %v229 = vld [vmem:[%s3 + $0x98] sm:$0xff]
    %v230 = vld [vmem:[%s3 + $0xa0] sm:$0xff]
    %v231 = vld [vmem:[%s3 + $0xa8] sm:$0xff]
    %v232 = vld [vmem:[%s3 + $0xb0] sm:$0xff]
    %v233 = vld [vmem:[%s3 + $0xb8] sm:$0xff]
    %v234 = vld [vmem:[%s3 + $0xc0] sm:$0xff]
    %v235 = vld [vmem:[%s3 + $0xc8] sm:$0xff]
    %v236 = vld [vmem:[%s3 + $0xd0] sm:$0xff]
    %v237 = vld [vmem:[%s3 + $0xd8] sm:$0xff]
    %v238 = vld [vmem:[%s3 + $0xe0] sm:$0xff]
    %v239 = vld [vmem:[%s3 + $0xe8] sm:$0xff]
    %v240 = vld [vmem:[%s3 + $0xf0] sm:$0xff]
    %v241 = vld [vmem:[%s3 + $0xf8] sm:$0xff]
    %v242 = vld [vmem:[%s3 + $0x100] sm:$0xff]
    %v243 = vld [vmem:[%s3 + $0x108] sm:$0xff]
    %v244 = vld [vmem:[%s3 + $0x110] sm:$0xff]
    %v245 = vld [vmem:[%s3 + $0x118] sm:$0xff]
    %v246 = vld [vmem:[%s3 + $0x120] sm:$0xff]
    %v247 = vld [vmem:[%s3 + $0x128] sm:$0xff]
    %v248 = vld [vmem:[%s3 + $0x130] sm:$0xff]
    %v249 = vld [vmem:[%s3 + $0x138] sm:$0xff]
    %v250 = vld [vmem:[%s3 + $0x140] sm:$0xff]
    %v251 = vld [vmem:[%s3 + $0x148] sm:$0xff]
    %v252 = vld [vmem:[%s3 + $0x150] sm:$0xff]
    %v253 = vld [vmem:[%s3 + $0x158] sm:$0xff]
    %v254 = vld [vmem:[%s3 + $0x160] sm:$0xff]
    %v255 = vld [vmem:[%s3 + $0x168] sm:$0xff]
    %v256 = vld [vmem:[%s3 + $0x170] sm:$0xff]
    %v257 = vld [vmem:[%s3 + $0x178] sm:$0xff]
    %v258 = vld [vmem:[%s3 + $0x180] sm:$0xff]
    %v259 = vld [vmem:[%s3 + $0x188] sm:$0xff]
    %v260 = vld [vmem:[%s3 + $0x190] sm:$0xff]
    %v261 = vld [vmem:[%s3 + $0x198] sm:$0xff]
    %v262 = vld [vmem:[%s3 + $0x1a0] sm:$0xff]
    %v263 = vld [vmem:[%s3 + $0x1a8] sm:$0xff]
    %v264 = vld [vmem:[%s3 + $0x1b0] sm:$0xff]
    %v265 = vld [vmem:[%s3 + $0x1b8] sm:$0xff]
    %v266 = vld [vmem:[%s3 + $0x1c0] sm:$0xff]
    %v267 = vld [vmem:[%s3 + $0x1c8] sm:$0xff]
    %v268 = vld [vmem:[%s3 + $0x1d0] sm:$0xff]
    %v269 = vld [vmem:[%s3 + $0x1d8] sm:$0xff]
    %v270 = vld [vmem:[%s3 + $0x1e0] sm:$0xff]
    %v271 = vld [vmem:[%s3 + $0x1e8] sm:$0xff]
    %v272 = vld [vmem:[%s3 + $0x1f0] sm:$0xff]
    %v273 = vld [vmem:[%s3 + $0x1f8] sm:$0xff]
    %v274 = vld [vmem:[%s4] sm:$0x1]
    %v276 = vlaneseq
    %v277 = vshrl.u32 %v276, 7
    %v278 = vsub.s32 0, %v277
    %v279 = vrot.slane %v274, %v278
    %281 = vmatprep.subr.mxu0 0.0
    %282 = vmatpush1.msra.mxu0 %v225
    %283 = vmatprep.subr.mxu0 0.0
    %284 = vmatpush1.msra.mxu0 %v224
    %285 = vmatprep.subr.mxu0 0.0
    %286 = vmatpush1.msra.mxu0 %v223
    %287 = vmatprep.subr.mxu0 0.0
    %288 = vmatpush1.msra.mxu0 %v222
    %289 = vmatprep.subr.mxu0 0.0
    %290 = vmatpush1.msra.mxu0 %v221
    %291 = vmatprep.subr.mxu0 0.0
    %292 = vmatpush1.msra.mxu0 %v220
    %293 = vmatprep.subr.mxu0 0.0
    %294 = vmatpush1.msra.mxu0 %v219
    %295 = vmatprep.subr.mxu0 0.0
    %296 = vmatpush1.msra.mxu0 %v218
    %297 = vmatprep.subr.mxu0 0.0
    %298 = vmatpush1.msra.mxu0 %v217
    %299 = vmatprep.subr.mxu0 0.0
    %300 = vmatpush1.msra.mxu0 %v216
    %301 = vmatprep.subr.mxu0 0.0
    %302 = vmatpush1.msra.mxu0 %v215
    %303 = vmatprep.subr.mxu0 0.0
    %304 = vmatpush1.msra.mxu0 %v214
    %305 = vmatprep.subr.mxu0 0.0
    %306 = vmatpush1.msra.mxu0 %v213
    %307 = vmatprep.subr.mxu0 0.0
    %308 = vmatpush1.msra.mxu0 %v212
    %309 = vmatprep.subr.mxu0 0.0
    %310 = vmatpush1.msra.mxu0 %v211
    %311 = vmatprep.subr.mxu0 0.0
    %312 = vmatpush1.msra.mxu0 %v210
    %313 = vmatprep.subr.mxu0 0.0
    %314 = vmatpush2.msra.mxu0 %v241
    %315 = vmatprep.subr.mxu0 0.0
    %316 = vmatpush2.msra.mxu0 %v240
    %317 = vmatprep.subr.mxu0 0.0
    %318 = vmatpush2.msra.mxu0 %v239
    %319 = vmatprep.subr.mxu0 0.0
    %320 = vmatpush2.msra.mxu0 %v238
    %321 = vmatprep.subr.mxu0 0.0
    %322 = vmatpush2.msra.mxu0 %v237
    %323 = vmatprep.subr.mxu0 0.0
    %324 = vmatpush2.msra.mxu0 %v236
    %325 = vmatprep.subr.mxu0 0.0
    %326 = vmatpush2.msra.mxu0 %v235
    %327 = vmatprep.subr.mxu0 0.0
    %328 = vmatpush2.msra.mxu0 %v234
    %329 = vmatprep.subr.mxu0 0.0
    %330 = vmatpush2.msra.mxu0 %v233
    %331 = vmatprep.subr.mxu0 0.0
    %332 = vmatpush2.msra.mxu0 %v232
    %333 = vmatprep.subr.mxu0 0.0
    %334 = vmatpush2.msra.mxu0 %v231
    %335 = vmatprep.subr.mxu0 0.0
    %336 = vmatpush2.msra.mxu0 %v230
    %337 = vmatprep.subr.mxu0 0.0
    %338 = vmatpush2.msra.mxu0 %v229
    %339 = vmatprep.subr.mxu0 0.0
    %340 = vmatpush2.msra.mxu0 %v228
    %341 = vmatprep.subr.mxu0 0.0
    %342 = vmatpush2.msra.mxu0 %v227
    %343 = vmatprep.subr.mxu0 0.0
    %344 = vmatpush2.msra.mxu0 %v226
    %345 = vmatprep.mubr.f32.mxu0 %v207
    %346 = vmatmul.mubr.f32.gmra.mxu0 %v206
    %v347 = vpop.f32.mrf.mxu0
    %v348 = vadd.f32 %v279, %v347
    %v349 = vpop.f32.mrf.mxu0
    %350 = vdwg.mxu0
    %351 = vmatprep.subr.mxu0 0.0
    %352 = vmatpush1.msra.mxu0 %v257
    %353 = vmatprep.subr.mxu0 0.0
    %354 = vmatpush1.msra.mxu0 %v256
    %355 = vmatprep.subr.mxu0 0.0
    %356 = vmatpush1.msra.mxu0 %v255
    %357 = vmatprep.subr.mxu0 0.0
    %358 = vmatpush1.msra.mxu0 %v254
    %359 = vmatprep.subr.mxu0 0.0
    %360 = vmatpush1.msra.mxu0 %v253
    %361 = vmatprep.subr.mxu0 0.0
    %362 = vmatpush1.msra.mxu0 %v252
    %363 = vmatprep.subr.mxu0 0.0
    %364 = vmatpush1.msra.mxu0 %v251
    %365 = vmatprep.subr.mxu0 0.0
    %366 = vmatpush1.msra.mxu0 %v250
    %367 = vmatprep.subr.mxu0 0.0
    %368 = vmatpush1.msra.mxu0 %v249
    %369 = vmatprep.subr.mxu0 0.0
    %370 = vmatpush1.msra.mxu0 %v248
    %371 = vmatprep.subr.mxu0 0.0
    %372 = vmatpush1.msra.mxu0 %v247
    %373 = vmatprep.subr.mxu0 0.0
    %374 = vmatpush1.msra.mxu0 %v246
    %375 = vmatprep.subr.mxu0 0.0
    %376 = vmatpush1.msra.mxu0 %v245
    %377 = vmatprep.subr.mxu0 0.0
    %378 = vmatpush1.msra.mxu0 %v244
    %379 = vmatprep.subr.mxu0 0.0
    %380 = vmatpush1.msra.mxu0 %v243
    %381 = vmatprep.subr.mxu0 0.0
    %382 = vmatpush1.msra.mxu0 %v242
    %383 = vmatprep.subr.mxu0 0.0
    %384 = vmatpush2.msra.mxu0 %v273
    %385 = vmatprep.subr.mxu0 0.0
    %386 = vmatpush2.msra.mxu0 %v272
    %387 = vmatprep.subr.mxu0 0.0
    %388 = vmatpush2.msra.mxu0 %v271
    %389 = vmatprep.subr.mxu0 0.0
    %390 = vmatpush2.msra.mxu0 %v270
    %391 = vmatprep.subr.mxu0 0.0
    %392 = vmatpush2.msra.mxu0 %v269
    %393 = vmatprep.subr.mxu0 0.0
    %394 = vmatpush2.msra.mxu0 %v268
    %395 = vmatprep.subr.mxu0 0.0
    %396 = vmatpush2.msra.mxu0 %v267
    %397 = vmatprep.subr.mxu0 0.0
    %398 = vmatpush2.msra.mxu0 %v266
    %399 = vmatprep.subr.mxu0 0.0
    %400 = vmatpush2.msra.mxu0 %v265
    %401 = vmatprep.subr.mxu0 0.0
    %402 = vmatpush2.msra.mxu0 %v264
    %403 = vmatprep.subr.mxu0 0.0
    %404 = vmatpush2.msra.mxu0 %v263
    %405 = vmatprep.subr.mxu0 0.0
    %406 = vmatpush2.msra.mxu0 %v262
    %407 = vmatprep.subr.mxu0 0.0
    %408 = vmatpush2.msra.mxu0 %v261
    %409 = vmatprep.subr.mxu0 0.0
    %410 = vmatpush2.msra.mxu0 %v260
    %411 = vmatprep.subr.mxu0 0.0
    %412 = vmatpush2.msra.mxu0 %v259
    %413 = vmatprep.subr.mxu0 0.0
    %414 = vmatpush2.msra.mxu0 %v258
    %415 = vmatprep.mubr.f32.mxu0 %v209
    %416 = vmatmul.mubr.f32.gmra.mxu0 %v208
    %v417 = vpop.f32.mrf.mxu0
    %v418 = vadd.f32 %v348, %v417
    %v419 = vpop.f32.mrf.mxu0
    %420 = vdwg.mxu0
    %v421 = vxor.u32 %v418, 2147483648
    %v422 = vmul.f32 %v421, 1.442695
    %v423 = vpow.pop %v422
    %v424 = vadd.f32 %v423, 1.0
    %v425 = vrcp.pop %v424
    %v426 = vmul.f32 1.0, %v425
    %427 = vst [vmem:[#allocation2] sm:$0xff] %v426
    // Predicated region
    $region22: #{decoder_forward.1} parent=1 // pred_check
      _
    $region23: #{decoder_forward.1} parent=1 // pred_check_branch
      %429 = sbr.rel (0) target = $region25
    $region24: #{decoder_forward.1} parent=1 // pred_region
      %s431 = ssub.s32 128, 128
      %432 = vsyncadd [#allocation3], %s431
      %s434 = sshll.u32 [#allocation2], 4
      %s435 = int_to_ptr.vmem [resolvable:$true] %s434
      %437 = dma.vmem_to_hbm [thread:$0]  %s435, 128, %s5, [#allocation3]
    $region25: #{decoder_forward.1} parent=1 // pred_fallthru
      _
    // Predicated region
    $region26: #{decoder_forward.1} parent=1 // pred_check
      _
    $region27: #{decoder_forward.1} parent=1 // pred_check_branch
      %439 = sbr.rel (0) target = $region29
    $region28: #{decoder_forward.1} parent=1 // pred_region
      %440 = dma.done [#allocation3], 128
    $region29: #{decoder_forward.1} parent=1 // pred_fallthru
      _
    %441 = vsyncpa [#allocation3], 1

</llo_original>
